<compile_context>
chip_gen: v6e
topology: v6e:2x2x1
jax: 0.10.0
libtpu: 0.0.40
codegen_flags: <defaults>
</compile_context>

<pallas_src>
import jax
import jax.numpy as jnp
import numpy as np
from jax.experimental import pallas as pl
from jax.experimental.pallas import tpu as pltpu

_MIB = 1024 * 1024


def _round_up(x, m):
    return (x + m - 1) // m * m


def _align_tile(t, sub):
    """MXU-friendly row-tile rounding: 256-aligned when large, sublane otherwise."""
    if t >= 256:
        return _round_up(t, 256)
    return _round_up(max(t, sub), sub)


def _vmem_caps():
    """Generation-aware (working-set budget, scoped-vmem limit) in bytes."""
    try:
        cap = int(pltpu.get_tpu_info().vmem_capacity_bytes)
    except Exception:  # interpret mode / older jax: assume a 128-MiB part
        cap = 128 * _MIB
    if cap <= 96 * _MIB:
        # v7x-class (64 MiB / TC): stay well under the ceiling, leave room for
        # Mosaic internal scratch.
        limit = max(32 * _MIB, min(cap - 10 * _MIB, 54 * _MIB))
    else:
        # v5e / v6e (128 MiB VMEM): use most of it.
        limit = min(int(cap * 0.78), 100 * _MIB)
    budget = max(limit - 8 * _MIB, 24 * _MIB)
    return budget, limit


# ----------------------------------------------------------------------------
# Kernel
# ----------------------------------------------------------------------------
def _mlp_kernel(x_ref, w1_ref, b1_ref, w2_ref, b2_ref, o_ref, acc_ref):
    h_idx = pl.program_id(1)

    @pl.when(h_idx == 0)
    def _init():
        acc_ref[...] = jnp.zeros_like(acc_ref)

    # hidden = relu(x @ W1 + b1): MXU operands in the compute dtype, f32
    # accumulation; bias add + ReLU stay f32.  The activation cast happens here
    # (in-kernel) instead of in the wrapper to save HBM traffic.
    x = x_ref[...].astype(w1_ref.dtype)
    h = jnp.dot(x, w1_ref[...], preferred_element_type=jnp.float32) + b1_ref[...]
    h = jnp.maximum(h, 0.0)

    # acc += hidden_chunk @ W2_chunk  (exact: ReLU is elementwise over hidden)
    acc_ref[...] += jnp.dot(h.astype(w2_ref.dtype), w2_ref[...],
                            preferred_element_type=jnp.float32)

    @pl.when(h_idx == pl.num_programs(1) - 1)
    def _finalize():
        o_ref[...] = (acc_ref[...] + b2_ref[...]).astype(o_ref.dtype)


# ----------------------------------------------------------------------------
# Parameter preparation (done once, outside the per-call path)
# ----------------------------------------------------------------------------
def prepare_mlp_params(w1_t, b1, w2_t, b2, *, compute_dtype=jnp.bfloat16,
                       hidden_chunk=None):
    """Pad + cast the weights once.

    w1_t: (input_dim, hidden_dim)   -- torch linear1.weight, already transposed
    w2_t: (hidden_dim, output_dim)  -- torch linear2.weight, already transposed
    """
    input_dim, hidden_dim = w1_t.shape
    assert w2_t.shape[0] == hidden_dim
    output_dim = w2_t.shape[1]

    cdt = np.dtype(compute_dtype)
    ci = cdt.itemsize
    out_p = _round_up(output_dim, 128)
    hid_p = _round_up(hidden_dim, 128)
    budget, vmem_limit = _vmem_caps()

    def weight_bytes(hc, streaming):
        nbuf = 2 if streaming else 1          # streamed slabs are double-buffered
        return (nbuf * ((input_dim * hc + hc * out_p) * ci + hc * 4)
                + out_p * 4)                  # b2 stays single-resident

    if hidden_chunk is not None:
        hid_chunk = min(_round_up(int(hidden_chunk), 128), hid_p)
    elif weight_bytes(hid_p, False) <= budget // 2:
        hid_chunk = hid_p                     # whole weight set stays VMEM-resident
    else:
        # Stream the hidden dimension in chunks (double-buffered weight slabs).
        hid_chunk = hid_p
        while hid_chunk > 128 and weight_bytes(hid_chunk, True) > budget // 2:
            hid_chunk = max(128, _round_up(hid_chunk // 2, 128))
        # TODO(synk): extreme input/output dims would also need K/N grid splits;
        # not required for MLP-sized layers.

    hid_pad = _round_up(hidden_dim, hid_chunk)

    w1_p = jnp.pad(w1_t, ((0, 0), (0, hid_pad - hidden_dim))).astype(cdt)
    w2_p = jnp.pad(w2_t, ((0, hid_pad - hidden_dim),
                          (0, out_p - output_dim))).astype(cdt)
    # biases stay f32 (added to the f32 accumulator)
    b1_p = jnp.pad(b1, (0, hid_pad - hidden_dim)).astype(jnp.float32).reshape(1, hid_pad)
    b2_p = jnp.pad(b2, (0, out_p - output_dim)).astype(jnp.float32).reshape(1, out_p)

    return dict(w1=w1_p, b1=b1_p, w2=w2_p, b2=b2_p,
                input_dim=input_dim, hidden_dim=hidden_dim, output_dim=output_dim,
                hid_pad=hid_pad, hid_chunk=hid_chunk, out_p=out_p,
                compute_dtype=cdt, vmem_budget=budget, vmem_limit=vmem_limit)


# ----------------------------------------------------------------------------
# Forward pass
# ----------------------------------------------------------------------------
def mlp_layer(x, params, *, tile_m=512):
    p = params
    input_dim, output_dim = p['input_dim'], p['output_dim']
    hid_pad, hid_chunk, out_p = p['hid_pad'], p['hid_chunk'], p['out_p']
    cdt = p['compute_dtype']
    ci = cdt.itemsize
    out_dtype = x.dtype
    xi = np.dtype(x.dtype).itemsize
    oi = np.dtype(out_dtype).itemsize

    orig_shape = x.shape
    assert orig_shape[-1] == input_dim
    x2d = x.reshape(-1, input_dim)
    M = x2d.shape[0]

    n_h = hid_pad // hid_chunk
    streaming = n_h > 1
    budget = p['vmem_budget']
    sub = 8

    def working_set(tile):
        nbuf_w = 2 if streaming else 1
        wgts = (nbuf_w * ((input_dim * hid_chunk + hid_chunk * out_p) * ci
                          + hid_chunk * 4)
                + out_p * 4)
        acts = 2 * tile * input_dim * xi + 2 * tile * out_p * oi  # dbl-buffered x / out
        interm = (tile * input_dim * ci      # in-kernel cast of the x tile
                  + tile * hid_chunk * 4     # f32 hidden
                  + tile * hid_chunk * ci    # compute-dtype copy of hidden
                  + tile * out_p * 4)        # f32 (acc + b2) temporary
        acc = tile * out_p * 4               # f32 accumulator scratch
        return wgts + acts + interm + acc

    M_sub = _round_up(max(M, 1), sub)
    tile = max(sub, min(_align_tile(tile_m, sub), M_sub))
    while tile > sub and working_set(tile) > budget:
        tile = max(sub, _align_tile(tile // 2, sub))

    # v7x has 2 TensorCores: give the ("parallel") row axis >= 2 steps whenever
    # the batch is large enough for two >=256-row tiles.
    if _round_up(M_sub, tile) // tile == 1 and M_sub >= 512:
        tile = _align_tile(_round_up(-(-M_sub // 2), sub), sub)

    M_p = _round_up(M, tile)
    if M_p != M:
        x2d = jnp.pad(x2d, ((0, M_p - M), (0, 0)))
    n_rows = M_p // tile
    grid = (n_rows, n_h)

    ws = working_set(tile)
    vmem_limit = int(min(p['vmem_limit'], max(32 * _MIB, ws + 8 * _MIB)))

    flops = 2 * M_p * (input_dim * hid_pad + hid_pad * out_p)
    weight_reads = n_rows if streaming else 1
    bytes_accessed = int(M_p * input_dim * xi
                         + weight_reads * (input_dim * hid_pad + hid_pad * out_p) * ci
                         + (hid_pad + out_p) * 4
                         + M_p * out_p * oi)

    def _run(single_buffer_invariant):
        def spec(shape, imap, invariant):
            if single_buffer_invariant and invariant:
                # Grid-invariant blocks: double-buffering only burns VMEM.
                return pl.BlockSpec(shape, imap, pipeline_mode=pl.Buffered(1))
            return pl.BlockSpec(shape, imap)

        in_specs = [
            pl.BlockSpec((tile, input_dim), lambda i, h: (i, 0)),               # x
            spec((input_dim, hid_chunk), lambda i, h: (0, h), not streaming),    # W1
            spec((1, hid_chunk), lambda i, h: (0, h), not streaming),            # b1
            spec((hid_chunk, out_p), lambda i, h: (h, 0), not streaming),        # W2
            spec((1, out_p), lambda i, h: (0, 0), True),                         # b2
        ]
        out_spec = pl.BlockSpec((tile, out_p), lambda i, h: (i, 0))

        return pl.pallas_call(
            _mlp_kernel,
            out_shape=jax.ShapeDtypeStruct((M_p, out_p), out_dtype),
            grid_spec=pltpu.PrefetchScalarGridSpec(
                num_scalar_prefetch=0,
                grid=grid,
                in_specs=in_specs,
                out_specs=out_spec,
                scratch_shapes=[pltpu.VMEM((tile, out_p), jnp.float32)],
            ),
            compiler_params=pltpu.CompilerParams(
                dimension_semantics=("parallel", "arbitrary"),
                vmem_limit_bytes=vmem_limit,
            ),
            cost_estimate=pl.CostEstimate(
                flops=flops, transcendentals=0, bytes_accessed=bytes_accessed),
        )(x2d, p['w1'], p['b1'], p['w2'], p['b2'])

    try:
        out_padded = _run(True)
    except Exception:
        # TODO(synk): drop this fallback once pl.Buffered(1) single-buffering is
        # guaranteed available on all deployed jax versions.
        out_padded = _run(False)

    out = out_padded[:M, :output_dim]
    return out.reshape(*orig_shape[:-1], output_dim)


def mlp_forward(x, w1_t, b1, w2_t, b2, *, tile_m=512, **prep_kwargs):
    """One-shot convenience wrapper (prepares params per call)."""
    params = prepare_mlp_params(w1_t, b1, w2_t, b2, **prep_kwargs)
    return mlp_layer(x, params, tile_m=tile_m)


def init_mlp_params(key, input_dim, hidden_dim, output_dim, dtype=jnp.float32):
    """Deterministic init mimicking nn.Linear's uniform(-1/sqrt(fan_in), ...)."""
    k1, k2, k3, k4 = jax.random.split(key, 4)
    bound1 = 1.0 / (input_dim ** 0.5)
    bound2 = 1.0 / (hidden_dim ** 0.5)
    # stored already transposed: (in, out)
    w1_t = jax.random.uniform(k1, (input_dim, hidden_dim), dtype,
                              minval=-bound1, maxval=bound1)
    b1 = jax.random.uniform(k2, (hidden_dim,), dtype, minval=-bound1, maxval=bound1)
    w2_t = jax.random.uniform(k3, (hidden_dim, output_dim), dtype,
                              minval=-bound2, maxval=bound2)
    b2 = jax.random.uniform(k4, (output_dim,), dtype, minval=-bound2, maxval=bound2)
    return w1_t, b1, w2_t, b2


def _reference(x, w1_t, b1, w2_t, b2):
    return jnp.maximum(x @ w1_t + b1, 0.0) @ w2_t + b2


if __name__ == "__main__":
    key = jax.random.PRNGKey(0)
    k_x, k_p, k_x2, k_p2 = jax.random.split(key, 4)

    # --- 1) toy shape (batch=2, seq=8, in=32, hid=64, out=16), exact f32 path
    batch, seq = 2, 8
    input_dim, hidden_dim, output_dim = 32, 64, 16
    x = jax.random.normal(k_x, (batch, seq, input_dim), jnp.float32)
    w1_t, b1, w2_t, b2 = init_mlp_params(k_p, input_dim, hidden_dim, output_dim)

    params_f32 = prepare_mlp_params(w1_t, b1, w2_t, b2, compute_dtype=jnp.float32)
    out = mlp_layer(x, params_f32)
    jax.block_until_ready(out)
    ref = _reference(x, w1_t, b1, w2_t, b2)
    assert out.shape == (batch, seq, output_dim)
    assert jnp.allclose(out, ref, atol=1e-5, rtol=1e-5), "f32 toy mismatch"

    # --- 2) multi-row-tile grid, default bf16 MXU operands, f32 accumulation
    B2, S2 = 4, 128
    d_in, d_hid, d_out = 128, 256, 64
    x2 = jax.random.normal(k_x2, (B2, S2, d_in), jnp.float32)
    w1b, b1b, w2b, b2b = init_mlp_params(k_p2, d_in, d_hid, d_out)
    ref2 = _reference(x2, w1b, b1b, w2b, b2b)

    params_bf16 = prepare_mlp_params(w1b, b1b, w2b, b2b)   # bf16 default
    out2 = mlp_layer(x2, params_bf16)
    jax.block_until_ready(out2)
    assert out2.shape == (B2, S2, d_out)
    assert jnp.allclose(out2, ref2, atol=1e-1, rtol=1e-1), "bf16 tiled mismatch"

    # --- 3) hidden-axis streaming (accumulator path), exact f32 check
    params_chunk_f32 = prepare_mlp_params(w1b, b1b, w2b, b2b,
                                          compute_dtype=jnp.float32,
                                          hidden_chunk=128)
    out3 = mlp_layer(x2, params_chunk_f32)
    jax.block_until_ready(out3)
    assert jnp.allclose(out3, ref2, atol=1e-4, rtol=1e-4), "hidden-chunk f32 mismatch"

    # --- 4) hidden-axis streaming with bf16 MXU operands
    params_chunk_bf16 = prepare_mlp_params(w1b, b1b, w2b, b2b, hidden_chunk=128)
    out4 = mlp_layer(x2, params_chunk_bf16)
    jax.block_until_ready(out4)
    assert jnp.allclose(out4, ref2, atol=1e-1, rtol=1e-1), "hidden-chunk bf16 mismatch"

    print("KERNEL_OK")
</pallas_src>

<mosaic_0001>
module attributes {stable_mosaic.version = 11 : i64} {
  func.func @_mlp_kernel(%arg0: i32, %arg1: i32, %arg2: memref<16x32xf32, #tpu.memory_space<vmem>>, %arg3: memref<32x128xf32, #tpu.memory_space<vmem>>, %arg4: memref<1x128xf32, #tpu.memory_space<vmem>>, %arg5: memref<128x128xf32, #tpu.memory_space<vmem>>, %arg6: memref<1x128xf32, #tpu.memory_space<vmem>>, %arg7: memref<16x128xf32, #tpu.memory_space<vmem>>, %arg8: memref<16x128xf32, #tpu.memory_space<vmem>>) attributes {dimension_semantics = [#tpu.dimension_semantics<parallel>, #tpu.dimension_semantics<arbitrary>], iteration_bounds = array<i64: 1, 1>, scalar_prefetch = 0 : i64, scratch_operands = 1 : i64, tpu.core_type = #tpu.core_type<tc>, window_params = [{transform_indices = @transform_0, window_bounds = array<i64: 16, 32>}, {pipeline_mode = #tpu.pipeline_mode<synchronous>, transform_indices = @transform_1, window_bounds = array<i64: 32, 128>}, {pipeline_mode = #tpu.pipeline_mode<synchronous>, transform_indices = @transform_2, window_bounds = array<i64: 1, 128>}, {pipeline_mode = #tpu.pipeline_mode<synchronous>, transform_indices = @transform_3, window_bounds = array<i64: 128, 128>}, {pipeline_mode = #tpu.pipeline_mode<synchronous>, transform_indices = @transform_4, window_bounds = array<i64: 1, 128>}, {transform_indices = @transform_5, window_bounds = array<i64: 16, 128>}]} {
    %c0_i32 = arith.constant 0 : i32
    %0 = arith.cmpi eq, %arg1, %c0_i32 : i32
    %1 = arith.extui %0 : i1 to i32
    %c0_i32_0 = arith.constant 0 : i32
    %2 = arith.cmpi ne, %1, %c0_i32_0 : i32
    scf.if %2 {
      %cst_16 = arith.constant 0.000000e+00 : f32
      %19 = vector.broadcast %cst_16 : f32 to vector<16x128xf32>
      %c0_17 = arith.constant 0 : index
      %c0_18 = arith.constant 0 : index
      %20 = vector.load %arg8[%c0_17, %c0_18] : memref<16x128xf32, #tpu.memory_space<vmem>>, vector<16x128xf32>
      tpu.vector_store %arg8[%c0_17, %c0_18], %19 {strides = array<i32>} : memref<16x128xf32, #tpu.memory_space<vmem>>, vector<16x128xf32>,
    } else {
    }
    %c0 = arith.constant 0 : index
    %c0_1 = arith.constant 0 : index
    %3 = vector.load %arg2[%c0, %c0_1] : memref<16x32xf32, #tpu.memory_space<vmem>>, vector<16x32xf32>
    %c0_2 = arith.constant 0 : index
    %c0_3 = arith.constant 0 : index
    %4 = vector.load %arg3[%c0_2, %c0_3] : memref<32x128xf32, #tpu.memory_space<vmem>>, vector<32x128xf32>
    %cst = arith.constant dense<0.000000e+00> : vector<16x128xf32>
    %5 = tpu.matmul %3, %4, %cst {dimension_numbers = #tpu.dot_dimension_numbers<[1], [0], [0], [1], [0, 0, 1, 1], [], []>} : vector<16x32xf32>, vector<32x128xf32>, vector<16x128xf32> -> vector<16x128xf32>
    %c0_4 = arith.constant 0 : index
    %c0_5 = arith.constant 0 : index
    %6 = vector.load %arg4[%c0_4, %c0_5] : memref<1x128xf32, #tpu.memory_space<vmem>>, vector<1x128xf32>
    %7 = vector.broadcast %6 : vector<1x128xf32> to vector<16x128xf32>
    %8 = arith.addf %5, %7 : vector<16x128xf32>
    %cst_6 = arith.constant 0.000000e+00 : f32
    %9 = vector.broadcast %cst_6 : f32 to vector<16x128xf32>
    %10 = arith.maximumf %8, %9 : vector<16x128xf32>
    %c0_7 = arith.constant 0 : index
    %c0_8 = arith.constant 0 : index
    %11 = vector.load %arg8[%c0_7, %c0_8] : memref<16x128xf32, #tpu.memory_space<vmem>>, vector<16x128xf32>
    %c0_9 = arith.constant 0 : index
    %c0_10 = arith.constant 0 : index
    %12 = vector.load %arg5[%c0_9, %c0_10] : memref<128x128xf32, #tpu.memory_space<vmem>>, vector<128x128xf32>
    %cst_11 = arith.constant dense<0.000000e+00> : vector<16x128xf32>
    %13 = tpu.matmul %10, %12, %cst_11 {dimension_numbers = #tpu.dot_dimension_numbers<[1], [0], [0], [1], [0, 0, 1, 1], [], []>} : vector<16x128xf32>, vector<128x128xf32>, vector<16x128xf32> -> vector<16x128xf32>
    %14 = arith.addf %11, %13 : vector<16x128xf32>
    %c0_12 = arith.constant 0 : index
    %c0_13 = arith.constant 0 : index
    %15 = vector.load %arg8[%c0_12, %c0_13] : memref<16x128xf32, #tpu.memory_space<vmem>>, vector<16x128xf32>
    tpu.vector_store %arg8[%c0_12, %c0_13], %14 {strides = array<i32>} : memref<16x128xf32, #tpu.memory_space<vmem>>, vector<16x128xf32>,
    %c0_i32_14 = arith.constant 0 : i32
    %16 = arith.cmpi eq, %arg1, %c0_i32_14 : i32
    %17 = arith.extui %16 : i1 to i32
    %c0_i32_15 = arith.constant 0 : i32
    %18 = arith.cmpi ne, %17, %c0_i32_15 : i32
    scf.if %18 {
      %c0_16 = arith.constant 0 : index
      %c0_17 = arith.constant 0 : index
      %19 = vector.load %arg8[%c0_16, %c0_17] : memref<16x128xf32, #tpu.memory_space<vmem>>, vector<16x128xf32>
      %c0_18 = arith.constant 0 : index
      %c0_19 = arith.constant 0 : index
      %20 = vector.load %arg6[%c0_18, %c0_19] : memref<1x128xf32, #tpu.memory_space<vmem>>, vector<1x128xf32>
      %21 = vector.broadcast %20 : vector<1x128xf32> to vector<16x128xf32>
      %22 = arith.addf %19, %21 : vector<16x128xf32>
      %c0_20 = arith.constant 0 : index
      %c0_21 = arith.constant 0 : index
      %23 = vector.load %arg7[%c0_20, %c0_21] : memref<16x128xf32, #tpu.memory_space<vmem>>, vector<16x128xf32>
      tpu.vector_store %arg7[%c0_20, %c0_21], %22 {strides = array<i32>} : memref<16x128xf32, #tpu.memory_space<vmem>>, vector<16x128xf32>,
    } else {
    }
    return
  }
  func.func @transform_0(%arg0: i32, %arg1: i32) -> (i32, i32) {
    %c0_i32 = arith.constant 0 : i32
    %c0_i32_0 = arith.constant 0 : i32
    return %arg0, %c0_i32 : i32, i32
  }
  func.func @transform_1(%arg0: i32, %arg1: i32) -> (i32, i32) {
    %c0_i32 = arith.constant 0 : i32
    %c0_i32_0 = arith.constant 0 : i32
    return %c0_i32, %arg1 : i32, i32
  }
  func.func @transform_2(%arg0: i32, %arg1: i32) -> (i32, i32) {
    %c0_i32 = arith.constant 0 : i32
    %c0_i32_0 = arith.constant 0 : i32
    return %c0_i32, %arg1 : i32, i32
  }
  func.func @transform_3(%arg0: i32, %arg1: i32) -> (i32, i32) {
    %c0_i32 = arith.constant 0 : i32
    %c0_i32_0 = arith.constant 0 : i32
    return %arg1, %c0_i32 : i32, i32
  }
  func.func @transform_4(%arg0: i32, %arg1: i32) -> (i32, i32) {
    %c0_i32 = arith.constant 0 : i32
    %c0_i32_0 = arith.constant 0 : i32
    %c0_i32_1 = arith.constant 0 : i32
    return %c0_i32, %c0_i32_0 : i32, i32
  }
  func.func @transform_5(%arg0: i32, %arg1: i32) -> (i32, i32) {
    %c0_i32 = arith.constant 0 : i32
    %c0_i32_0 = arith.constant 0 : i32
    return %arg0, %c0_i32 : i32, i32
  }
}

module attributes {stable_mosaic.version = 11 : i64} {
  func.func @_mlp_kernel(%arg0: i32, %arg1: i32, %arg2: memref<16x32xf32, #tpu.memory_space<vmem>>, %arg3: memref<32x128xf32, #tpu.memory_space<vmem>>, %arg4: memref<1x128xf32, #tpu.memory_space<vmem>>, %arg5: memref<128x128xf32, #tpu.memory_space<vmem>>, %arg6: memref<1x128xf32, #tpu.memory_space<vmem>>, %arg7: memref<16x128xf32, #tpu.memory_space<vmem>>, %arg8: memref<16x128xf32, #tpu.memory_space<vmem>>) attributes {dimension_semantics = [#tpu.dimension_semantics<parallel>, #tpu.dimension_semantics<arbitrary>], iteration_bounds = array<i64: 1, 1>, scalar_prefetch = 0 : i64, scratch_operands = 1 : i64, tpu.core_type = #tpu.core_type<tc>, window_params = [{transform_indices = @transform_0, window_bounds = array<i64: 16, 32>}, {transform_indices = @transform_1, window_bounds = array<i64: 32, 128>}, {transform_indices = @transform_2, window_bounds = array<i64: 1, 128>}, {transform_indices = @transform_3, window_bounds = array<i64: 128, 128>}, {pipeline_mode = #tpu.pipeline_mode<synchronous>, transform_indices = @transform_4, window_bounds = array<i64: 1, 128>}, {transform_indices = @transform_5, window_bounds = array<i64: 16, 128>}]} {
    %c0_i32 = arith.constant 0 : i32
    %0 = arith.cmpi eq, %arg1, %c0_i32 : i32
    %1 = arith.extui %0 : i1 to i32
    %c0_i32_0 = arith.constant 0 : i32
    %2 = arith.cmpi ne, %1, %c0_i32_0 : i32
    scf.if %2 {
      %cst_16 = arith.constant 0.000000e+00 : f32
      %19 = vector.broadcast %cst_16 : f32 to vector<16x128xf32>
      %c0_17 = arith.constant 0 : index
      %c0_18 = arith.constant 0 : index
      %20 = vector.load %arg8[%c0_17, %c0_18] : memref<16x128xf32, #tpu.memory_space<vmem>>, vector<16x128xf32>
      tpu.vector_store %arg8[%c0_17, %c0_18], %19 {strides = array<i32>} : memref<16x128xf32, #tpu.memory_space<vmem>>, vector<16x128xf32>,
    } else {
    }
    %c0 = arith.constant 0 : index
    %c0_1 = arith.constant 0 : index
    %3 = vector.load %arg2[%c0, %c0_1] : memref<16x32xf32, #tpu.memory_space<vmem>>, vector<16x32xf32>
    %c0_2 = arith.constant 0 : index
    %c0_3 = arith.constant 0 : index
    %4 = vector.load %arg3[%c0_2, %c0_3] : memref<32x128xf32, #tpu.memory_space<vmem>>, vector<32x128xf32>
    %cst = arith.constant dense<0.000000e+00> : vector<16x128xf32>
    %5 = tpu.matmul %3, %4, %cst {dimension_numbers = #tpu.dot_dimension_numbers<[1], [0], [0], [1], [0, 0, 1, 1], [], []>} : vector<16x32xf32>, vector<32x128xf32>, vector<16x128xf32> -> vector<16x128xf32>
    %c0_4 = arith.constant 0 : index
    %c0_5 = arith.constant 0 : index
    %6 = vector.load %arg4[%c0_4, %c0_5] : memref<1x128xf32, #tpu.memory_space<vmem>>, vector<1x128xf32>
    %7 = vector.broadcast %6 : vector<1x128xf32> to vector<16x128xf32>
    %8 = arith.addf %5, %7 : vector<16x128xf32>
    %cst_6 = arith.constant 0.000000e+00 : f32
    %9 = vector.broadcast %cst_6 : f32 to vector<16x128xf32>
    %10 = arith.maximumf %8, %9 : vector<16x128xf32>
    %c0_7 = arith.constant 0 : index
    %c0_8 = arith.constant 0 : index
    %11 = vector.load %arg8[%c0_7, %c0_8] : memref<16x128xf32, #tpu.memory_space<vmem>>, vector<16x128xf32>
    %c0_9 = arith.constant 0 : index
    %c0_10 = arith.constant 0 : index
    %12 = vector.load %arg5[%c0_9, %c0_10] : memref<128x128xf32, #tpu.memory_space<vmem>>, vector<128x128xf32>
    %cst_11 = arith.constant dense<0.000000e+00> : vector<16x128xf32>
    %13 = tpu.matmul %10, %12, %cst_11 {dimension_numbers = #tpu.dot_dimension_numbers<[1], [0], [0], [1], [0, 0, 1, 1], [], []>} : vector<16x128xf32>, vector<128x128xf32>, vector<16x128xf32> -> vector<16x128xf32>
    %14 = arith.addf %11, %13 : vector<16x128xf32>
    %c0_12 = arith.constant 0 : index
    %c0_13 = arith.constant 0 : index
    %15 = vector.load %arg8[%c0_12, %c0_13] : memref<16x128xf32, #tpu.memory_space<vmem>>, vector<16x128xf32>
    tpu.vector_store %arg8[%c0_12, %c0_13], %14 {strides = array<i32>} : memref<16x128xf32, #tpu.memory_space<vmem>>, vector<16x128xf32>,
    %c0_i32_14 = arith.constant 0 : i32
    %16 = arith.cmpi eq, %arg1, %c0_i32_14 : i32
    %17 = arith.extui %16 : i1 to i32
    %c0_i32_15 = arith.constant 0 : i32
    %18 = arith.cmpi ne, %17, %c0_i32_15 : i32
    scf.if %18 {
      %c0_16 = arith.constant 0 : index
      %c0_17 = arith.constant 0 : index
      %19 = vector.load %arg8[%c0_16, %c0_17] : memref<16x128xf32, #tpu.memory_space<vmem>>, vector<16x128xf32>
      %c0_18 = arith.constant 0 : index
      %c0_19 = arith.constant 0 : index
      %20 = vector.load %arg6[%c0_18, %c0_19] : memref<1x128xf32, #tpu.memory_space<vmem>>, vector<1x128xf32>
      %21 = vector.broadcast %20 : vector<1x128xf32> to vector<16x128xf32>
      %22 = arith.addf %19, %21 : vector<16x128xf32>
      %c0_20 = arith.constant 0 : index
      %c0_21 = arith.constant 0 : index
      %23 = vector.load %arg7[%c0_20, %c0_21] : memref<16x128xf32, #tpu.memory_space<vmem>>, vector<16x128xf32>
      tpu.vector_store %arg7[%c0_20, %c0_21], %22 {strides = array<i32>} : memref<16x128xf32, #tpu.memory_space<vmem>>, vector<16x128xf32>,
    } else {
    }
    return
  }
  func.func @transform_0(%arg0: i32, %arg1: i32) -> (i32, i32) {
    %c0_i32 = arith.constant 0 : i32
    %c0_i32_0 = arith.constant 0 : i32
    return %arg0, %c0_i32 : i32, i32
  }
  func.func @transform_1(%arg0: i32, %arg1: i32) -> (i32, i32) {
    %c0_i32 = arith.constant 0 : i32
    %c0_i32_0 = arith.constant 0 : i32
    return %c0_i32, %arg1 : i32, i32
  }
  func.func @transform_2(%arg0: i32, %arg1: i32) -> (i32, i32) {
    %c0_i32 = arith.constant 0 : i32
    %c0_i32_0 = arith.constant 0 : i32
    return %c0_i32, %arg1 : i32, i32
  }
  func.func @transform_3(%arg0: i32, %arg1: i32) -> (i32, i32) {
    %c0_i32 = arith.constant 0 : i32
    %c0_i32_0 = arith.constant 0 : i32
    return %arg1, %c0_i32 : i32, i32
  }
  func.func @transform_4(%arg0: i32, %arg1: i32) -> (i32, i32) {
    %c0_i32 = arith.constant 0 : i32
    %c0_i32_0 = arith.constant 0 : i32
    %c0_i32_1 = arith.constant 0 : i32
    return %c0_i32, %c0_i32_0 : i32, i32
  }
  func.func @transform_5(%arg0: i32, %arg1: i32) -> (i32, i32) {
    %c0_i32 = arith.constant 0 : i32
    %c0_i32_0 = arith.constant 0 : i32
    return %arg0, %c0_i32 : i32, i32
  }
}

</mosaic_0001>

<llo_original>
// kernel: tpu_custom_call.1
$region0: #{tpu_custom_call.1}
  #allocation0 [shape = 'u32[]', space=smem, size = 0x4, offset = 0x4, fixed_abs, tag = 'smem constant byte address 0x4 - core index']
  #allocation1 [shape = 'u32[144,128]{1,0:T(1,128)}', space=vmem, size = 0x12000, scoped, tag = 'internal scratch']
  #allocation2 [shape = 'f32[16,128]{1,0:T(8,128)}', space=vmem, size = 0x2000, scoped, tag = 'scratch operand']
  %s0 = inlined_call_operand.hbm [shape: f32[16,32], index: 0, kind: input, shape index: {}]
  %s1 = inlined_call_operand.hbm [shape: f32[32,128], index: 1, kind: input, shape index: {}]
  %s2 = inlined_call_operand.vmem [shape: f32[1,128], index: 2, kind: input, shape index: {}]
  %s3 = inlined_call_operand.hbm [shape: f32[128,128], index: 3, kind: input, shape index: {}]
  %s4 = inlined_call_operand.vmem [shape: f32[1,128], index: 4, kind: input, shape index: {}]
  %s5 = inlined_call_operand.hbm [shape: f32[16,128], index: 5, kind: output, shape index: {}]
  %s6 = sld [smem:[#allocation0]]
  $region50: #{tpu_custom_call.1} parent=0
    _
  %s8 = ssub.s32 1, %s6
  %s9 = scalar_select 0, %s8, %s6
  $region1: #{tpu_custom_call.1} parent=0
    #allocation3 [shape = 'u8[8192]{0}', space=vmem, size = 0x2000, scoped, tag = 'input window, operand 0, single buffered']
    #allocation4 [shape = 's32[1]{0}', space=sflag, size = 0x4, scoped, tag = 'scoped memory for tpu_custom_call.1']
    #allocation5 [shape = 's32[1]{0}', space=sflag, size = 0x4, scoped, tag = 'scoped memory for tpu_custom_call.1']
    #allocation6 [shape = 'u8[16384]{0}', space=vmem, size = 0x4000, scoped, tag = 'input window, operand 1, single buffered']
    #allocation7 [shape = 's32[1]{0}', space=sflag, size = 0x4, scoped, tag = 'scoped memory for tpu_custom_call.1']
    #allocation8 [shape = 'u8[65536]{0}', space=vmem, size = 0x10000, scoped, tag = 'input window, operand 3, single buffered']
    #allocation9 [shape = 'u8[8192]{0}', space=vmem, size = 0x2000, scoped, tag = 'output window, operand 0, single buffered']
    %10 = vsyncpa [#allocation4], 0
    %11 = vsyncpa [#allocation7], 0
    %12 = vsyncpa [#allocation5], 0
    // Predicated region
    $region2: #{tpu_custom_call.1} parent=1 // pred_check
      _
    $region3: #{tpu_custom_call.1} parent=1 // pred_check_branch
      %14 = sbr.rel (0) target = $region5
    $region4: #{tpu_custom_call.1} parent=1 // pred_region
      %s16 = ssub.s32 256, 256
      %17 = vsyncadd [#allocation4], %s16
      %s18 = sshll.u32 [#allocation3], 4
      %s19 = int_to_ptr.vmem [resolvable:$true] %s18
      %24 = dma.hbm_to_vmem [thread:$0]  %s0, 256, %s19, [#allocation4], 128, 128, 8
    $region5: #{tpu_custom_call.1} parent=1 // pred_fallthru
      _
    // Predicated region
    $region6: #{tpu_custom_call.1} parent=1 // pred_check
      _
    $region7: #{tpu_custom_call.1} parent=1 // pred_check_branch
      %26 = sbr.rel (0) target = $region9
    $region8: #{tpu_custom_call.1} parent=1 // pred_region
      %s28 = ssub.s32 512, 512
      %29 = vsyncadd [#allocation7], %s28
      %s30 = sshll.u32 [#allocation6], 4
      %s31 = int_to_ptr.vmem [resolvable:$true] %s30
      %36 = dma.hbm_to_vmem [thread:$0]  %s1, 512, %s31, [#allocation7], 128, 128, 8
    $region9: #{tpu_custom_call.1} parent=1 // pred_fallthru
      _
    // Predicated region
    $region10: #{tpu_custom_call.1} parent=1 // pred_check
      _
    $region11: #{tpu_custom_call.1} parent=1 // pred_check_branch
      %38 = sbr.rel (0) target = $region13
    $region12: #{tpu_custom_call.1} parent=1 // pred_region
      _
    $region13: #{tpu_custom_call.1} parent=1 // pred_fallthru
      _
    // Predicated region
    $region14: #{tpu_custom_call.1} parent=1 // pred_check
      _
    $region15: #{tpu_custom_call.1} parent=1 // pred_check_branch
      %40 = sbr.rel (0) target = $region17
    $region16: #{tpu_custom_call.1} parent=1 // pred_region
      %s42 = ssub.s32 2048, 2048
      %43 = vsyncadd [#allocation7], %s42
      %s44 = sshll.u32 [#allocation8], 4
      %s45 = int_to_ptr.vmem [resolvable:$true] %s44
      %50 = dma.hbm_to_vmem [thread:$0]  %s3, 2048, %s45, [#allocation7], 128, 128, 8
    $region17: #{tpu_custom_call.1} parent=1 // pred_fallthru
      _
    // Predicated region
    $region18: #{tpu_custom_call.1} parent=1 // pred_check
      _
    $region19: #{tpu_custom_call.1} parent=1 // pred_check_branch
      %52 = sbr.rel (0) target = $region21
    $region20: #{tpu_custom_call.1} parent=1 // pred_region
      _
    $region21: #{tpu_custom_call.1} parent=1 // pred_fallthru
      _
    // Predicated region
    $region22: #{tpu_custom_call.1} parent=1 // pred_check
      _
    $region23: #{tpu_custom_call.1} parent=1 // pred_check_branch
      %54 = sbr.rel (0) target = $region25
    $region24: #{tpu_custom_call.1} parent=1 // pred_region
      %55 = dma.done [#allocation4], 256
    $region25: #{tpu_custom_call.1} parent=1 // pred_fallthru
      _
    // Predicated region
    $region26: #{tpu_custom_call.1} parent=1 // pred_check
      _
    $region27: #{tpu_custom_call.1} parent=1 // pred_check_branch
      %57 = sbr.rel (0) target = $region29
    $region28: #{tpu_custom_call.1} parent=1 // pred_region
      %58 = dma.done [#allocation7], 512
    $region29: #{tpu_custom_call.1} parent=1 // pred_fallthru
      _
    // Predicated region
    $region30: #{tpu_custom_call.1} parent=1 // pred_check
      _
    $region31: #{tpu_custom_call.1} parent=1 // pred_check_branch
      %60 = sbr.rel (0) target = $region33
    $region32: #{tpu_custom_call.1} parent=1 // pred_region
      %61 = dma.done [#allocation7], 2048
    $region33: #{tpu_custom_call.1} parent=1 // pred_fallthru
      _
    %p62 = scmp.eq.s32.totalorder 0, 0
    // Predicated region
    $region34: #{tpu_custom_call.1} parent=1 // pred_check
      %p63 = pneg %p62
    $region35: #{tpu_custom_call.1} parent=1 // pred_check_branch
      %65 = sbr.rel (%p63) target = $region37
    $region36: #{tpu_custom_call.1} parent=1 // pred_region
      %66 = vst [vmem:[#allocation2] sm:$0xff] 0.0
      %67 = vst [vmem:[#allocation2 + $0x8] sm:$0xff] 0.0
    $region37: #{tpu_custom_call.1} parent=1 // pred_fallthru
      _
    %v68 = vld [vmem:[#allocation3] sm:$0xff]
    %v69 = vld [vmem:[#allocation3 + $0x8] sm:$0xff]
    %v70 = vld [vmem:[#allocation6] sm:$0xff]
    %v71 = vld [vmem:[#allocation6 + $0x8] sm:$0xff]
    %v72 = vld [vmem:[#allocation6 + $0x10] sm:$0xff]
    %v73 = vld [vmem:[#allocation6 + $0x18] sm:$0xff]
    %v74 = vld [vmem:[%s2] sm:$0x1]
    %v76 = vlaneseq
    %v77 = vshrl.u32 %v76, 7
    %v78 = vsub.s32 0, %v77
    %v79 = vrot.slane %v74, %v78
    %vm81 = vcmask 261120
    %v83 = vsel %vm81, %v68, 0
    %v86 = vsel %vm81, %v69, 0
    %88 = vmatprep.subr.mxu0 0.0
    %89 = vmatpush1.msra.mxu0 0.0
    %90 = vmatprep.subr.mxu0 0.0
    %91 = vmatpush1.msra.mxu0 0.0
    %92 = vmatprep.subr.mxu0 0.0
    %93 = vmatpush1.msra.mxu0 0.0
    %94 = vmatprep.subr.mxu0 0.0
    %95 = vmatpush1.msra.mxu0 0.0
    %96 = vmatprep.subr.mxu0 0.0
    %97 = vmatpush1.msra.mxu0 0.0
    %98 = vmatprep.subr.mxu0 0.0
    %99 = vmatpush1.msra.mxu0 0.0
    %100 = vmatprep.subr.mxu0 0.0
    %101 = vmatpush1.msra.mxu0 0.0
    %102 = vmatprep.subr.mxu0 0.0
    %103 = vmatpush1.msra.mxu0 0.0
    %104 = vmatprep.subr.mxu0 0.0
    %105 = vmatpush1.msra.mxu0 0.0
    %106 = vmatprep.subr.mxu0 0.0
    %107 = vmatpush1.msra.mxu0 0.0
    %108 = vmatprep.subr.mxu0 0.0
    %109 = vmatpush1.msra.mxu0 0.0
    %110 = vmatprep.subr.mxu0 0.0
    %111 = vmatpush1.msra.mxu0 0.0
    %112 = vmatprep.subr.mxu0 0.0
    %113 = vmatpush1.msra.mxu0 %v73
    %114 = vmatprep.subr.mxu0 0.0
    %115 = vmatpush1.msra.mxu0 %v72
    %116 = vmatprep.subr.mxu0 0.0
    %117 = vmatpush1.msra.mxu0 %v71
    %118 = vmatprep.subr.mxu0 0.0
    %119 = vmatpush1.msra.mxu0 %v70
    %120 = vmatprep.subr.mxu0 0.0
    %121 = vmatpush2.msra.mxu0 0.0
    %122 = vmatprep.subr.mxu0 0.0
    %123 = vmatpush2.msra.mxu0 0.0
    %124 = vmatprep.subr.mxu0 0.0
    %125 = vmatpush2.msra.mxu0 0.0
    %126 = vmatprep.subr.mxu0 0.0
    %127 = vmatpush2.msra.mxu0 0.0
    %128 = vmatprep.subr.mxu0 0.0
    %129 = vmatpush2.msra.mxu0 0.0
    %130 = vmatprep.subr.mxu0 0.0
    %131 = vmatpush2.msra.mxu0 0.0
    %132 = vmatprep.subr.mxu0 0.0
    %133 = vmatpush2.msra.mxu0 0.0
    %134 = vmatprep.subr.mxu0 0.0
    %135 = vmatpush2.msra.mxu0 0.0
    %136 = vmatprep.subr.mxu0 0.0
    %137 = vmatpush2.msra.mxu0 0.0
    %138 = vmatprep.subr.mxu0 0.0
    %139 = vmatpush2.msra.mxu0 0.0
    %140 = vmatprep.subr.mxu0 0.0
    %141 = vmatpush2.msra.mxu0 0.0
    %142 = vmatprep.subr.mxu0 0.0
    %143 = vmatpush2.msra.mxu0 0.0
    %144 = vmatprep.subr.mxu0 0.0
    %145 = vmatpush2.msra.mxu0 0.0
    %146 = vmatprep.subr.mxu0 0.0
    %147 = vmatpush2.msra.mxu0 0.0
    %148 = vmatprep.subr.mxu0 0.0
    %149 = vmatpush2.msra.mxu0 0.0
    %150 = vmatprep.subr.mxu0 0.0
    %151 = vmatpush2.msra.mxu0 0.0
    %152 = vmatprep.mubr.f32.mxu0 0.0
    %153 = vmatmul.mubr.f32.gmra.mxu0 %v83
    %v154 = vpop.f32.mrf.mxu0
    %v155 = vadd.f32 %v79, %v154
    %v156 = vpop.f32.mrf.mxu0
    %157 = vmatprep.mubr.f32.mxu0 0.0
    %158 = vmatmul.mubr.f32.gmra.mxu0 %v86
    %v159 = vpop.f32.mrf.mxu0
    %v160 = vadd.f32 %v79, %v159
    %v161 = vpop.f32.mrf.mxu0
    %162 = vdwg.mxu0
    %v163 = vmax.f32 %v155, 0.0
    %v164 = vmax.f32 %v160, 0.0
    %v165 = vld [vmem:[#allocation2] sm:$0xff]
    %v166 = vld [vmem:[#allocation2 + $0x8] sm:$0xff]
    %v167 = vld [vmem:[#allocation8] sm:$0xff]
    %v168 = vld [vmem:[#allocation8 + $0x8] sm:$0xff]
    %v169 = vld [vmem:[#allocation8 + $0x10] sm:$0xff]
    %v170 = vld [vmem:[#allocation8 + $0x18] sm:$0xff]
    %v171 = vld [vmem:[#allocation8 + $0x20] sm:$0xff]
    %v172 = vld [vmem:[#allocation8 + $0x28] sm:$0xff]
    %v173 = vld [vmem:[#allocation8 + $0x30] sm:$0xff]
    %v174 = vld [vmem:[#allocation8 + $0x38] sm:$0xff]
    %v175 = vld [vmem:[#allocation8 + $0x40] sm:$0xff]
    %v176 = vld [vmem:[#allocation8 + $0x48] sm:$0xff]
    %v177 = vld [vmem:[#allocation8 + $0x50] sm:$0xff]
    %v178 = vld [vmem:[#allocation8 + $0x58] sm:$0xff]
    %v179 = vld [vmem:[#allocation8 + $0x60] sm:$0xff]
    %v180 = vld [vmem:[#allocation8 + $0x68] sm:$0xff]
    %v181 = vld [vmem:[#allocation8 + $0x70] sm:$0xff]
    %v182 = vld [vmem:[#allocation8 + $0x78] sm:$0xff]
    %183 = vmatprep.subr.mxu0 0.0
    %184 = vmatpush1.msra.mxu0 %v182
    %185 = vmatprep.subr.mxu0 0.0
    %186 = vmatpush1.msra.mxu0 %v181
    %187 = vmatprep.subr.mxu0 0.0
    %188 = vmatpush1.msra.mxu0 %v180
    %189 = vmatprep.subr.mxu0 0.0
    %190 = vmatpush1.msra.mxu0 %v179
    %191 = vmatprep.subr.mxu0 0.0
    %192 = vmatpush1.msra.mxu0 %v178
    %193 = vmatprep.subr.mxu0 0.0
    %194 = vmatpush1.msra.mxu0 %v177
    %195 = vmatprep.subr.mxu0 0.0
    %196 = vmatpush1.msra.mxu0 %v176
    %197 = vmatprep.subr.mxu0 0.0
    %198 = vmatpush1.msra.mxu0 %v175
    %199 = vmatprep.subr.mxu0 0.0
    %200 = vmatpush1.msra.mxu0 %v174
    %201 = vmatprep.subr.mxu0 0.0
    %202 = vmatpush1.msra.mxu0 %v173
    %203 = vmatprep.subr.mxu0 0.0
    %204 = vmatpush1.msra.mxu0 %v172
    %205 = vmatprep.subr.mxu0 0.0
    %206 = vmatpush1.msra.mxu0 %v171
    %207 = vmatprep.subr.mxu0 0.0
    %208 = vmatpush1.msra.mxu0 %v170
    %209 = vmatprep.subr.mxu0 0.0
    %210 = vmatpush1.msra.mxu0 %v169
    %211 = vmatprep.subr.mxu0 0.0
    %212 = vmatpush1.msra.mxu0 %v168
    %213 = vmatprep.subr.mxu0 0.0
    %214 = vmatpush1.msra.mxu0 %v167
    %215 = vmatprep.subr.mxu0 0.0
    %216 = vmatpush2.msra.mxu0 0.0
    %217 = vmatprep.subr.mxu0 0.0
    %218 = vmatpush2.msra.mxu0 0.0
    %219 = vmatprep.subr.mxu0 0.0
    %220 = vmatpush2.msra.mxu0 0.0
    %221 = vmatprep.subr.mxu0 0.0
    %222 = vmatpush2.msra.mxu0 0.0
    %223 = vmatprep.subr.mxu0 0.0
    %224 = vmatpush2.msra.mxu0 0.0
    %225 = vmatprep.subr.mxu0 0.0
    %226 = vmatpush2.msra.mxu0 0.0
    %227 = vmatprep.subr.mxu0 0.0
    %228 = vmatpush2.msra.mxu0 0.0
    %229 = vmatprep.subr.mxu0 0.0
    %230 = vmatpush2.msra.mxu0 0.0
    %231 = vmatprep.subr.mxu0 0.0
    %232 = vmatpush2.msra.mxu0 0.0
    %233 = vmatprep.subr.mxu0 0.0
    %234 = vmatpush2.msra.mxu0 0.0
    %235 = vmatprep.subr.mxu0 0.0
    %236 = vmatpush2.msra.mxu0 0.0
    %237 = vmatprep.subr.mxu0 0.0
    %238 = vmatpush2.msra.mxu0 0.0
    %239 = vmatprep.subr.mxu0 0.0
    %240 = vmatpush2.msra.mxu0 0.0
    %241 = vmatprep.subr.mxu0 0.0
    %242 = vmatpush2.msra.mxu0 0.0
    %243 = vmatprep.subr.mxu0 0.0
    %244 = vmatpush2.msra.mxu0 0.0
    %245 = vmatprep.subr.mxu0 0.0
    %246 = vmatpush2.msra.mxu0 0.0
    %247 = vmatprep.mubr.f32.mxu0 0.0
    %248 = vmatmul.mubr.f32.gmra.mxu0 %v163
    %v249 = vpop.f32.mrf.mxu0
    %v250 = vadd.f32 0.0, %v249
    %v251 = vpop.f32.mrf.mxu0
    %252 = vmatprep.mubr.f32.mxu0 0.0
    %253 = vmatmul.mubr.f32.gmra.mxu0 %v164
    %v254 = vpop.f32.mrf.mxu0
    %v255 = vadd.f32 0.0, %v254
    %v256 = vpop.f32.mrf.mxu0
    %257 = vdwg.mxu0
    %v258 = vadd.f32 %v165, %v250
    %v259 = vadd.f32 %v166, %v255
    %260 = vst [vmem:[#allocation2] sm:$0xff] %v258
    %261 = vst [vmem:[#allocation2 + $0x8] sm:$0xff] %v259
    // Predicated region
    $region38: #{tpu_custom_call.1} parent=1 // pred_check
      %p262 = pneg %p62
    $region39: #{tpu_custom_call.1} parent=1 // pred_check_branch
      %264 = sbr.rel (%p262) target = $region41
    $region40: #{tpu_custom_call.1} parent=1 // pred_region
      %v265 = vld [vmem:[#allocation2] sm:$0xff]
      %v266 = vld [vmem:[#allocation2 + $0x8] sm:$0xff]
      %v267 = vld [vmem:[%s4] sm:$0x1]
      %v269 = vlaneseq
      %v270 = vshrl.u32 %v269, 7
      %v271 = vsub.s32 0, %v270
      %v272 = vrot.slane %v267, %v271
      %v274 = vadd.f32 %v265, %v272
      %v275 = vadd.f32 %v266, %v272
      %276 = vst [vmem:[#allocation9] sm:$0xff] %v274
      %277 = vst [vmem:[#allocation9 + $0x8] sm:$0xff] %v275
    $region41: #{tpu_custom_call.1} parent=1 // pred_fallthru
      _
    // Predicated region
    $region42: #{tpu_custom_call.1} parent=1 // pred_check
      _
    $region43: #{tpu_custom_call.1} parent=1 // pred_check_branch
      %279 = sbr.rel (0) target = $region45
    $region44: #{tpu_custom_call.1} parent=1 // pred_region
      %s281 = ssub.s32 256, 256
      %282 = vsyncadd [#allocation5], %s281
      %s283 = sshll.u32 [#allocation9], 4
      %s284 = int_to_ptr.vmem [resolvable:$true] %s283
      %289 = dma.vmem_to_hbm [thread:$0]  %s284, 256, %s5, [#allocation5], 128, 128, 8
    $region45: #{tpu_custom_call.1} parent=1 // pred_fallthru
      _
    // Predicated region
    $region46: #{tpu_custom_call.1} parent=1 // pred_check
      _
    $region47: #{tpu_custom_call.1} parent=1 // pred_check_branch
      %291 = sbr.rel (0) target = $region49
    $region48: #{tpu_custom_call.1} parent=1 // pred_region
      %292 = dma.done [#allocation5], 256
    $region49: #{tpu_custom_call.1} parent=1 // pred_fallthru
      _
    %293 = vsyncpa [#allocation4], 1
    %294 = vsyncpa [#allocation7], 1
    %295 = vsyncpa [#allocation5], 1

// kernel: tpu_custom_call.1
$region0: #{tpu_custom_call.1}
  #allocation0 [shape = 'u32[]', space=smem, size = 0x4, offset = 0x4, fixed_abs, tag = 'smem constant byte address 0x4 - core index']
  #allocation1 [shape = 'u32[144,128]{1,0:T(1,128)}', space=vmem, size = 0x12000, scoped, tag = 'internal scratch']
  #allocation2 [shape = 'f32[16,128]{1,0:T(8,128)}', space=vmem, size = 0x2000, scoped, tag = 'scratch operand']
  %s0 = inlined_call_operand.hbm [shape: f32[16,32], index: 0, kind: input, shape index: {}]
  %s1 = inlined_call_operand.hbm [shape: f32[32,128], index: 1, kind: input, shape index: {}]
  %s2 = inlined_call_operand.vmem [shape: f32[1,128], index: 2, kind: input, shape index: {}]
  %s3 = inlined_call_operand.hbm [shape: f32[128,128], index: 3, kind: input, shape index: {}]
  %s4 = inlined_call_operand.vmem [shape: f32[1,128], index: 4, kind: input, shape index: {}]
  %s5 = inlined_call_operand.hbm [shape: f32[16,128], index: 5, kind: output, shape index: {}]
  %s6 = sld [smem:[#allocation0]]
  $region50: #{tpu_custom_call.1} parent=0
    _
  %s8 = ssub.s32 1, %s6
  %s9 = scalar_select 0, %s8, %s6
  $region1: #{tpu_custom_call.1} parent=0
    #allocation3 [shape = 'u8[8192]{0}', space=vmem, size = 0x2000, scoped, tag = 'input window, operand 0, single buffered']
    #allocation4 [shape = 's32[1]{0}', space=sflag, size = 0x4, scoped, tag = 'scoped memory for tpu_custom_call.1']
    #allocation5 [shape = 's32[1]{0}', space=sflag, size = 0x4, scoped, tag = 'scoped memory for tpu_custom_call.1']
    #allocation6 [shape = 'u8[16384]{0}', space=vmem, size = 0x4000, scoped, tag = 'input window, operand 1, single buffered']
    #allocation7 [shape = 's32[1]{0}', space=sflag, size = 0x4, scoped, tag = 'scoped memory for tpu_custom_call.1']
    #allocation8 [shape = 'u8[65536]{0}', space=vmem, size = 0x10000, scoped, tag = 'input window, operand 3, single buffered']
    #allocation9 [shape = 'u8[8192]{0}', space=vmem, size = 0x2000, scoped, tag = 'output window, operand 0, single buffered']
    %10 = vsyncpa [#allocation4], 0
    %11 = vsyncpa [#allocation7], 0
    %12 = vsyncpa [#allocation5], 0
    // Predicated region
    $region2: #{tpu_custom_call.1} parent=1 // pred_check
      _
    $region3: #{tpu_custom_call.1} parent=1 // pred_check_branch
      %14 = sbr.rel (0) target = $region5
    $region4: #{tpu_custom_call.1} parent=1 // pred_region
      %s16 = ssub.s32 256, 256
      %17 = vsyncadd [#allocation4], %s16
      %s18 = sshll.u32 [#allocation3], 4
      %s19 = int_to_ptr.vmem [resolvable:$true] %s18
      %24 = dma.hbm_to_vmem [thread:$0]  %s0, 256, %s19, [#allocation4], 128, 128, 8
    $region5: #{tpu_custom_call.1} parent=1 // pred_fallthru
      _
    // Predicated region
    $region6: #{tpu_custom_call.1} parent=1 // pred_check
      _
    $region7: #{tpu_custom_call.1} parent=1 // pred_check_branch
      %26 = sbr.rel (0) target = $region9
    $region8: #{tpu_custom_call.1} parent=1 // pred_region
      %s28 = ssub.s32 512, 512
      %29 = vsyncadd [#allocation7], %s28
      %s30 = sshll.u32 [#allocation6], 4
      %s31 = int_to_ptr.vmem [resolvable:$true] %s30
      %36 = dma.hbm_to_vmem [thread:$0]  %s1, 512, %s31, [#allocation7], 128, 128, 8
    $region9: #{tpu_custom_call.1} parent=1 // pred_fallthru
      _
    // Predicated region
    $region10: #{tpu_custom_call.1} parent=1 // pred_check
      _
    $region11: #{tpu_custom_call.1} parent=1 // pred_check_branch
      %38 = sbr.rel (0) target = $region13
    $region12: #{tpu_custom_call.1} parent=1 // pred_region
      _
    $region13: #{tpu_custom_call.1} parent=1 // pred_fallthru
      _
    // Predicated region
    $region14: #{tpu_custom_call.1} parent=1 // pred_check
      _
    $region15: #{tpu_custom_call.1} parent=1 // pred_check_branch
      %40 = sbr.rel (0) target = $region17
    $region16: #{tpu_custom_call.1} parent=1 // pred_region
      %s42 = ssub.s32 2048, 2048
      %43 = vsyncadd [#allocation7], %s42
      %s44 = sshll.u32 [#allocation8], 4
      %s45 = int_to_ptr.vmem [resolvable:$true] %s44
      %50 = dma.hbm_to_vmem [thread:$0]  %s3, 2048, %s45, [#allocation7], 128, 128, 8
    $region17: #{tpu_custom_call.1} parent=1 // pred_fallthru
      _
    // Predicated region
    $region18: #{tpu_custom_call.1} parent=1 // pred_check
      _
    $region19: #{tpu_custom_call.1} parent=1 // pred_check_branch
      %52 = sbr.rel (0) target = $region21
    $region20: #{tpu_custom_call.1} parent=1 // pred_region
      _
    $region21: #{tpu_custom_call.1} parent=1 // pred_fallthru
      _
    // Predicated region
    $region22: #{tpu_custom_call.1} parent=1 // pred_check
      _
    $region23: #{tpu_custom_call.1} parent=1 // pred_check_branch
      %54 = sbr.rel (0) target = $region25
    $region24: #{tpu_custom_call.1} parent=1 // pred_region
      %55 = dma.done [#allocation4], 256
    $region25: #{tpu_custom_call.1} parent=1 // pred_fallthru
      _
    // Predicated region
    $region26: #{tpu_custom_call.1} parent=1 // pred_check
      _
    $region27: #{tpu_custom_call.1} parent=1 // pred_check_branch
      %57 = sbr.rel (0) target = $region29
    $region28: #{tpu_custom_call.1} parent=1 // pred_region
      %58 = dma.done [#allocation7], 512
    $region29: #{tpu_custom_call.1} parent=1 // pred_fallthru
      _
    // Predicated region
    $region30: #{tpu_custom_call.1} parent=1 // pred_check
      _
    $region31: #{tpu_custom_call.1} parent=1 // pred_check_branch
      %60 = sbr.rel (0) target = $region33
    $region32: #{tpu_custom_call.1} parent=1 // pred_region
      %61 = dma.done [#allocation7], 2048
    $region33: #{tpu_custom_call.1} parent=1 // pred_fallthru
      _
    %p62 = scmp.eq.s32.totalorder 0, 0
    // Predicated region
    $region34: #{tpu_custom_call.1} parent=1 // pred_check
      %p63 = pneg %p62
    $region35: #{tpu_custom_call.1} parent=1 // pred_check_branch
      %65 = sbr.rel (%p63) target = $region37
    $region36: #{tpu_custom_call.1} parent=1 // pred_region
      %66 = vst [vmem:[#allocation2] sm:$0xff] 0.0
      %67 = vst [vmem:[#allocation2 + $0x8] sm:$0xff] 0.0
    $region37: #{tpu_custom_call.1} parent=1 // pred_fallthru
      _
    %v68 = vld [vmem:[#allocation3] sm:$0xff]
    %v69 = vld [vmem:[#allocation3 + $0x8] sm:$0xff]
    %v70 = vld [vmem:[#allocation6] sm:$0xff]
    %v71 = vld [vmem:[#allocation6 + $0x8] sm:$0xff]
    %v72 = vld [vmem:[#allocation6 + $0x10] sm:$0xff]
    %v73 = vld [vmem:[#allocation6 + $0x18] sm:$0xff]
    %v74 = vld [vmem:[%s2] sm:$0x1]
    %v76 = vlaneseq
    %v77 = vshrl.u32 %v76, 7
    %v78 = vsub.s32 0, %v77
    %v79 = vrot.slane %v74, %v78
    %vm81 = vcmask 261120
    %v83 = vsel %vm81, %v68, 0
    %v86 = vsel %vm81, %v69, 0
    %88 = vmatprep.subr.mxu0 0.0
    %89 = vmatpush1.msra.mxu0 0.0
    %90 = vmatprep.subr.mxu0 0.0
    %91 = vmatpush1.msra.mxu0 0.0
    %92 = vmatprep.subr.mxu0 0.0
    %93 = vmatpush1.msra.mxu0 0.0
    %94 = vmatprep.subr.mxu0 0.0
    %95 = vmatpush1.msra.mxu0 0.0
    %96 = vmatprep.subr.mxu0 0.0
    %97 = vmatpush1.msra.mxu0 0.0
    %98 = vmatprep.subr.mxu0 0.0
    %99 = vmatpush1.msra.mxu0 0.0
    %100 = vmatprep.subr.mxu0 0.0
    %101 = vmatpush1.msra.mxu0 0.0
    %102 = vmatprep.subr.mxu0 0.0
    %103 = vmatpush1.msra.mxu0 0.0
    %104 = vmatprep.subr.mxu0 0.0
    %105 = vmatpush1.msra.mxu0 0.0
    %106 = vmatprep.subr.mxu0 0.0
    %107 = vmatpush1.msra.mxu0 0.0
    %108 = vmatprep.subr.mxu0 0.0
    %109 = vmatpush1.msra.mxu0 0.0
    %110 = vmatprep.subr.mxu0 0.0
    %111 = vmatpush1.msra.mxu0 0.0
    %112 = vmatprep.subr.mxu0 0.0
    %113 = vmatpush1.msra.mxu0 %v73
    %114 = vmatprep.subr.mxu0 0.0
    %115 = vmatpush1.msra.mxu0 %v72
    %116 = vmatprep.subr.mxu0 0.0
    %117 = vmatpush1.msra.mxu0 %v71
    %118 = vmatprep.subr.mxu0 0.0
    %119 = vmatpush1.msra.mxu0 %v70
    %120 = vmatprep.subr.mxu0 0.0
    %121 = vmatpush2.msra.mxu0 0.0
    %122 = vmatprep.subr.mxu0 0.0
    %123 = vmatpush2.msra.mxu0 0.0
    %124 = vmatprep.subr.mxu0 0.0
    %125 = vmatpush2.msra.mxu0 0.0
    %126 = vmatprep.subr.mxu0 0.0
    %127 = vmatpush2.msra.mxu0 0.0
    %128 = vmatprep.subr.mxu0 0.0
    %129 = vmatpush2.msra.mxu0 0.0
    %130 = vmatprep.subr.mxu0 0.0
    %131 = vmatpush2.msra.mxu0 0.0
    %132 = vmatprep.subr.mxu0 0.0
    %133 = vmatpush2.msra.mxu0 0.0
    %134 = vmatprep.subr.mxu0 0.0
    %135 = vmatpush2.msra.mxu0 0.0
    %136 = vmatprep.subr.mxu0 0.0
    %137 = vmatpush2.msra.mxu0 0.0
    %138 = vmatprep.subr.mxu0 0.0
    %139 = vmatpush2.msra.mxu0 0.0
    %140 = vmatprep.subr.mxu0 0.0
    %141 = vmatpush2.msra.mxu0 0.0
    %142 = vmatprep.subr.mxu0 0.0
    %143 = vmatpush2.msra.mxu0 0.0
    %144 = vmatprep.subr.mxu0 0.0
    %145 = vmatpush2.msra.mxu0 0.0
    %146 = vmatprep.subr.mxu0 0.0
    %147 = vmatpush2.msra.mxu0 0.0
    %148 = vmatprep.subr.mxu0 0.0
    %149 = vmatpush2.msra.mxu0 0.0
    %150 = vmatprep.subr.mxu0 0.0
    %151 = vmatpush2.msra.mxu0 0.0
    %152 = vmatprep.mubr.f32.mxu0 0.0
    %153 = vmatmul.mubr.f32.gmra.mxu0 %v83
    %v154 = vpop.f32.mrf.mxu0
    %v155 = vadd.f32 %v79, %v154
    %v156 = vpop.f32.mrf.mxu0
    %157 = vmatprep.mubr.f32.mxu0 0.0
    %158 = vmatmul.mubr.f32.gmra.mxu0 %v86
    %v159 = vpop.f32.mrf.mxu0
    %v160 = vadd.f32 %v79, %v159
    %v161 = vpop.f32.mrf.mxu0
    %162 = vdwg.mxu0
    %v163 = vmax.f32 %v155, 0.0
    %v164 = vmax.f32 %v160, 0.0
    %v165 = vld [vmem:[#allocation2] sm:$0xff]
    %v166 = vld [vmem:[#allocation2 + $0x8] sm:$0xff]
    %v167 = vld [vmem:[#allocation8] sm:$0xff]
    %v168 = vld [vmem:[#allocation8 + $0x8] sm:$0xff]
    %v169 = vld [vmem:[#allocation8 + $0x10] sm:$0xff]
    %v170 = vld [vmem:[#allocation8 + $0x18] sm:$0xff]
    %v171 = vld [vmem:[#allocation8 + $0x20] sm:$0xff]
    %v172 = vld [vmem:[#allocation8 + $0x28] sm:$0xff]
    %v173 = vld [vmem:[#allocation8 + $0x30] sm:$0xff]
    %v174 = vld [vmem:[#allocation8 + $0x38] sm:$0xff]
    %v175 = vld [vmem:[#allocation8 + $0x40] sm:$0xff]
    %v176 = vld [vmem:[#allocation8 + $0x48] sm:$0xff]
    %v177 = vld [vmem:[#allocation8 + $0x50] sm:$0xff]
    %v178 = vld [vmem:[#allocation8 + $0x58] sm:$0xff]
    %v179 = vld [vmem:[#allocation8 + $0x60] sm:$0xff]
    %v180 = vld [vmem:[#allocation8 + $0x68] sm:$0xff]
    %v181 = vld [vmem:[#allocation8 + $0x70] sm:$0xff]
    %v182 = vld [vmem:[#allocation8 + $0x78] sm:$0xff]
    %183 = vmatprep.subr.mxu0 0.0
    %184 = vmatpush1.msra.mxu0 %v182
    %185 = vmatprep.subr.mxu0 0.0
    %186 = vmatpush1.msra.mxu0 %v181
    %187 = vmatprep.subr.mxu0 0.0
    %188 = vmatpush1.msra.mxu0 %v180
    %189 = vmatprep.subr.mxu0 0.0
    %190 = vmatpush1.msra.mxu0 %v179
    %191 = vmatprep.subr.mxu0 0.0
    %192 = vmatpush1.msra.mxu0 %v178
    %193 = vmatprep.subr.mxu0 0.0
    %194 = vmatpush1.msra.mxu0 %v177
    %195 = vmatprep.subr.mxu0 0.0
    %196 = vmatpush1.msra.mxu0 %v176
    %197 = vmatprep.subr.mxu0 0.0
    %198 = vmatpush1.msra.mxu0 %v175
    %199 = vmatprep.subr.mxu0 0.0
    %200 = vmatpush1.msra.mxu0 %v174
    %201 = vmatprep.subr.mxu0 0.0
    %202 = vmatpush1.msra.mxu0 %v173
    %203 = vmatprep.subr.mxu0 0.0
    %204 = vmatpush1.msra.mxu0 %v172
    %205 = vmatprep.subr.mxu0 0.0
    %206 = vmatpush1.msra.mxu0 %v171
    %207 = vmatprep.subr.mxu0 0.0
    %208 = vmatpush1.msra.mxu0 %v170
    %209 = vmatprep.subr.mxu0 0.0
    %210 = vmatpush1.msra.mxu0 %v169
    %211 = vmatprep.subr.mxu0 0.0
    %212 = vmatpush1.msra.mxu0 %v168
    %213 = vmatprep.subr.mxu0 0.0
    %214 = vmatpush1.msra.mxu0 %v167
    %215 = vmatprep.subr.mxu0 0.0
    %216 = vmatpush2.msra.mxu0 0.0
    %217 = vmatprep.subr.mxu0 0.0
    %218 = vmatpush2.msra.mxu0 0.0
    %219 = vmatprep.subr.mxu0 0.0
    %220 = vmatpush2.msra.mxu0 0.0
    %221 = vmatprep.subr.mxu0 0.0
    %222 = vmatpush2.msra.mxu0 0.0
    %223 = vmatprep.subr.mxu0 0.0
    %224 = vmatpush2.msra.mxu0 0.0
    %225 = vmatprep.subr.mxu0 0.0
    %226 = vmatpush2.msra.mxu0 0.0
    %227 = vmatprep.subr.mxu0 0.0
    %228 = vmatpush2.msra.mxu0 0.0
    %229 = vmatprep.subr.mxu0 0.0
    %230 = vmatpush2.msra.mxu0 0.0
    %231 = vmatprep.subr.mxu0 0.0
    %232 = vmatpush2.msra.mxu0 0.0
    %233 = vmatprep.subr.mxu0 0.0
    %234 = vmatpush2.msra.mxu0 0.0
    %235 = vmatprep.subr.mxu0 0.0
    %236 = vmatpush2.msra.mxu0 0.0
    %237 = vmatprep.subr.mxu0 0.0
    %238 = vmatpush2.msra.mxu0 0.0
    %239 = vmatprep.subr.mxu0 0.0
    %240 = vmatpush2.msra.mxu0 0.0
    %241 = vmatprep.subr.mxu0 0.0
    %242 = vmatpush2.msra.mxu0 0.0
    %243 = vmatprep.subr.mxu0 0.0
    %244 = vmatpush2.msra.mxu0 0.0
    %245 = vmatprep.subr.mxu0 0.0
    %246 = vmatpush2.msra.mxu0 0.0
    %247 = vmatprep.mubr.f32.mxu0 0.0
    %248 = vmatmul.mubr.f32.gmra.mxu0 %v163
    %v249 = vpop.f32.mrf.mxu0
    %v250 = vadd.f32 0.0, %v249
    %v251 = vpop.f32.mrf.mxu0
    %252 = vmatprep.mubr.f32.mxu0 0.0
    %253 = vmatmul.mubr.f32.gmra.mxu0 %v164
    %v254 = vpop.f32.mrf.mxu0
    %v255 = vadd.f32 0.0, %v254
    %v256 = vpop.f32.mrf.mxu0
    %257 = vdwg.mxu0
    %v258 = vadd.f32 %v165, %v250
    %v259 = vadd.f32 %v166, %v255
    %260 = vst [vmem:[#allocation2] sm:$0xff] %v258
    %261 = vst [vmem:[#allocation2 + $0x8] sm:$0xff] %v259
    // Predicated region
    $region38: #{tpu_custom_call.1} parent=1 // pred_check
      %p262 = pneg %p62
    $region39: #{tpu_custom_call.1} parent=1 // pred_check_branch
      %264 = sbr.rel (%p262) target = $region41
    $region40: #{tpu_custom_call.1} parent=1 // pred_region
      %v265 = vld [vmem:[#allocation2] sm:$0xff]
      %v266 = vld [vmem:[#allocation2 + $0x8] sm:$0xff]
      %v267 = vld [vmem:[%s4] sm:$0x1]
      %v269 = vlaneseq
      %v270 = vshrl.u32 %v269, 7
      %v271 = vsub.s32 0, %v270
      %v272 = vrot.slane %v267, %v271
      %v274 = vadd.f32 %v265, %v272
      %v275 = vadd.f32 %v266, %v272
      %276 = vst [vmem:[#allocation9] sm:$0xff] %v274
      %277 = vst [vmem:[#allocation9 + $0x8] sm:$0xff] %v275
    $region41: #{tpu_custom_call.1} parent=1 // pred_fallthru
      _
    // Predicated region
    $region42: #{tpu_custom_call.1} parent=1 // pred_check
      _
    $region43: #{tpu_custom_call.1} parent=1 // pred_check_branch
      %279 = sbr.rel (0) target = $region45
    $region44: #{tpu_custom_call.1} parent=1 // pred_region
      %s281 = ssub.s32 256, 256
      %282 = vsyncadd [#allocation5], %s281
      %s283 = sshll.u32 [#allocation9], 4
      %s284 = int_to_ptr.vmem [resolvable:$true] %s283
      %289 = dma.vmem_to_hbm [thread:$0]  %s284, 256, %s5, [#allocation5], 128, 128, 8
    $region45: #{tpu_custom_call.1} parent=1 // pred_fallthru
      _
    // Predicated region
    $region46: #{tpu_custom_call.1} parent=1 // pred_check
      _
    $region47: #{tpu_custom_call.1} parent=1 // pred_check_branch
      %291 = sbr.rel (0) target = $region49
    $region48: #{tpu_custom_call.1} parent=1 // pred_region
      %292 = dma.done [#allocation5], 256
    $region49: #{tpu_custom_call.1} parent=1 // pred_fallthru
      _
    %293 = vsyncpa [#allocation4], 1
    %294 = vsyncpa [#allocation7], 1
    %295 = vsyncpa [#allocation5], 1

</llo_original>
